<compile_context>
chip_gen: v5e
topology: v5e:2x2
jax: 0.10.0
libtpu: 0.0.40
codegen_flags: <defaults>
</compile_context>

<pallas_src>
import functools

import jax
import jax.numpy as jnp
from jax.experimental import pallas as pl
from jax.experimental.pallas import tpu as pltpu

HEAD_PAD = 128  # fused head output width: col 0 = mu, col 1 = raw sigma, rest padding


def _round_up(n, m):
    return ((n + m - 1) // m) * m


def _make_kernel(n_hidden, activation):
    """Kernel ref order:
       x, (W_0, b_0), ..., (W_{n-1}, b_{n-1}), W_head, b_head, out
    """
    if activation not in ("tanh", "relu"):
        raise ValueError(f"unsupported activation: {activation!r}")

    def kernel(*refs):
        x_ref = refs[0]
        layer_refs = refs[1:1 + 2 * n_hidden]
        wh_ref = refs[1 + 2 * n_hidden]
        bh_ref = refs[2 + 2 * n_hidden]
        out_ref = refs[3 + 2 * n_hidden]

        h = x_ref[...]  # (TILE_B, feat) bf16
        # Hidden stack: Linear + activation (static trip count -> unrolled at trace time).
        # MXU operands bf16, accumulation + bias + activation in f32.
        for i in range(n_hidden):
            w = layer_refs[2 * i][...]        # (in, out) bf16, resident in VMEM
            b = layer_refs[2 * i + 1][...]    # (1, out)  f32
            z = jnp.dot(h, w, preferred_element_type=jnp.float32) + b
            a = jnp.tanh(z) if activation == "tanh" else jnp.maximum(z, 0.0)
            h = a.astype(jnp.bfloat16)

        # Fused head: one matmul produces mu (lane 0) and raw sigma (lane 1) in a
        # 128-wide slab.  Raw slab is stored lane-dense & unmasked; softplus + slicing
        # happen in the wrapper.
        out_ref[...] = jnp.dot(h, wh_ref[...], preferred_element_type=jnp.float32) + bh_ref[...]

    return kernel


def pack_params(params):
    """One-time packing of PyTorch-convention params into kernel-ready layout.

    params: {"hidden": [(W [out,in], b [out]), ...], "mu": (W [1,h], b [1]),
             "sig": (W [1,h], b [1])}
    Returns kernel-ready pytree: hidden weights [in,out] bf16 + biases [1,out] f32, and
    a fused head weight [h, HEAD_PAD] bf16 / bias [1, HEAD_PAD] f32 (mu -> col 0,
    sig -> col 1, head biases folded in).
    """
    hidden = []
    for (w, b) in params["hidden"]:
        hidden.append((jnp.asarray(w, jnp.float32).T.astype(jnp.bfloat16),
                       jnp.asarray(b, jnp.float32).reshape(1, -1)))
    w_mu, b_mu = params["mu"]
    w_sig, b_sig = params["sig"]
    h = w_mu.shape[1]
    w_head = jnp.zeros((h, HEAD_PAD), jnp.float32)
    w_head = w_head.at[:, 0].set(jnp.asarray(w_mu, jnp.float32)[0])
    w_head = w_head.at[:, 1].set(jnp.asarray(w_sig, jnp.float32)[0])
    b_head = jnp.zeros((1, HEAD_PAD), jnp.float32)
    b_head = b_head.at[0, 0].set(jnp.asarray(b_mu, jnp.float32)[0])
    b_head = b_head.at[0, 1].set(jnp.asarray(b_sig, jnp.float32)[0])
    return {"hidden": hidden,
            "w_head": w_head.astype(jnp.bfloat16),
            "b_head": b_head}


def ensemble_network_forward(x, packed, activation="tanh", tile_b=1024):
    """EnsembleNetwork forward: hidden stack + fused head in a single Pallas call.

    x:      [batch, feat] float32
    packed: output of pack_params (weights pre-transposed bf16, heads fused)
    Returns (mu [batch,1], variance [batch,1]) in float32.
    """
    batch, feat = x.shape
    n_hidden = len(packed["hidden"])

    # Batch tiling: multiple of 8 sublanes; cap at ceil(batch/2) so batch > 8 always
    # yields >= 2 grid steps (v7x megacore), cap at tile_b for large batches.
    TILE_B = max(8, min(tile_b, _round_up(pl.cdiv(batch, 2), 8)))
    grid = (pl.cdiv(batch, TILE_B),)  # ragged last tile handled by Pallas (masked store)

    # Specs: x / out tiled over batch; all parameters resident (constant index_map,
    # block index never changes -> DMA'd once).
    const2d = lambda i: (0, 0)
    in_specs = [pl.BlockSpec((TILE_B, feat), lambda i: (i, 0))]
    flat_inputs = [x.astype(jnp.bfloat16)]
    for (w, b) in packed["hidden"]:
        in_specs.append(pl.BlockSpec(w.shape, const2d))
        flat_inputs.append(w)
        in_specs.append(pl.BlockSpec(b.shape, const2d))
        flat_inputs.append(b)
    in_specs.append(pl.BlockSpec(packed["w_head"].shape, const2d))
    flat_inputs.append(packed["w_head"])
    in_specs.append(pl.BlockSpec(packed["b_head"].shape, const2d))
    flat_inputs.append(packed["b_head"])

    head = pl.pallas_call(
        _make_kernel(n_hidden, activation),
        out_shape=jax.ShapeDtypeStruct((batch, HEAD_PAD), jnp.float32),
        grid=grid,
        in_specs=in_specs,
        out_specs=pl.BlockSpec((TILE_B, HEAD_PAD), lambda i: (i, 0)),
        compiler_params=pltpu.CompilerParams(
            dimension_semantics=("parallel",),
        ),
    )(*flat_inputs)

    mu = head[:, 0:1]
    var = jax.nn.softplus(head[:, 1:2]) + 1e-6  # fuses with the slice in XLA
    return mu, var


def init_params(key, hidden_sizes, input_start, input_dim):
    """Deterministic PyTorch-Linear-style init: U(-1/sqrt(fan_in), 1/sqrt(fan_in))."""
    in_feat = input_dim - input_start
    params = {"hidden": []}
    dims = [in_feat] + list(hidden_sizes)
    for i in range(len(hidden_sizes)):
        key, kw, kb = jax.random.split(key, 3)
        bound = 1.0 / jnp.sqrt(jnp.float32(dims[i]))
        w = jax.random.uniform(kw, (dims[i + 1], dims[i]), jnp.float32, -bound, bound)
        b = jax.random.uniform(kb, (dims[i + 1],), jnp.float32, -bound, bound)
        params["hidden"].append((w, b))
    for name in ("mu", "sig"):
        key, kw, kb = jax.random.split(key, 3)
        bound = 1.0 / jnp.sqrt(jnp.float32(hidden_sizes[-1]))
        w = jax.random.uniform(kw, (1, hidden_sizes[-1]), jnp.float32, -bound, bound)
        b = jax.random.uniform(kb, (1,), jnp.float32, -bound, bound)
        params[name] = (w, b)
    return params


def reference_forward(x, params, activation="tanh"):
    """Pure-JAX f32 reference mirroring the PyTorch module."""
    h = x
    for (w, b) in params["hidden"]:
        h = h @ w.T + b
        h = jnp.tanh(h) if activation == "tanh" else jnp.maximum(h, 0.0)
    mu = h @ params["mu"][0].T + params["mu"][1]
    sig = h @ params["sig"][0].T + params["sig"][1]
    var = jax.nn.softplus(sig) + 1e-6
    return mu, var


if __name__ == "__main__":
    # Small shapes consistent with the module: batch=8, input_dim=16, input_start=0,
    # hidden_sizes=[32, 32].
    hidden_sizes = [32, 32]
    input_start = 0
    input_dim = 16
    batch = 8

    key = jax.random.PRNGKey(0)
    key, kx = jax.random.split(key)
    x = jax.random.normal(kx, (batch, input_dim - input_start), jnp.float32)
    params = init_params(key, hidden_sizes, input_start, input_dim)

    # One-time parameter packing (pre-transpose, bf16 cast, fused head); NOT per call.
    packed = jax.block_until_ready(pack_params(params))

    fwd = jax.jit(functools.partial(ensemble_network_forward, activation="tanh"))
    mu, var = fwd(x, packed)
    jax.block_until_ready((mu, var))

    mu_ref, var_ref = reference_forward(x, params)
    assert mu.shape == (batch, 1) and var.shape == (batch, 1)
    # bf16 MXU operands -> relaxed tolerance vs. the f32 reference.
    assert jnp.allclose(mu, mu_ref, atol=2e-2, rtol=2e-2)
    assert jnp.allclose(var, var_ref, atol=2e-2, rtol=2e-2)
    assert bool(jnp.all(var > 0))

    print("KERNEL_OK")
</pallas_src>

<mosaic_0001>
module attributes {stable_mosaic.version = 11 : i64} {
  func.func @kernel(%arg0: i32, %arg1: memref<8x16xbf16, #tpu.memory_space<vmem>>, %arg2: memref<16x32xbf16, #tpu.memory_space<vmem>>, %arg3: memref<1x32xf32, #tpu.memory_space<vmem>>, %arg4: memref<32x32xbf16, #tpu.memory_space<vmem>>, %arg5: memref<1x32xf32, #tpu.memory_space<vmem>>, %arg6: memref<32x128xbf16, #tpu.memory_space<vmem>>, %arg7: memref<1x128xf32, #tpu.memory_space<vmem>>, %arg8: memref<8x128xf32, #tpu.memory_space<vmem>>) attributes {dimension_semantics = [#tpu.dimension_semantics<parallel>], iteration_bounds = array<i64: 1>, scalar_prefetch = 0 : i64, scratch_operands = 0 : i64, tpu.core_type = #tpu.core_type<tc>, window_params = [{transform_indices = @transform_0, window_bounds = array<i64: 8, 16>}, {pipeline_mode = #tpu.pipeline_mode<synchronous>, transform_indices = @transform_1, window_bounds = array<i64: 16, 32>}, {pipeline_mode = #tpu.pipeline_mode<synchronous>, transform_indices = @transform_2, window_bounds = array<i64: 1, 32>}, {pipeline_mode = #tpu.pipeline_mode<synchronous>, transform_indices = @transform_3, window_bounds = array<i64: 32, 32>}, {pipeline_mode = #tpu.pipeline_mode<synchronous>, transform_indices = @transform_4, window_bounds = array<i64: 1, 32>}, {pipeline_mode = #tpu.pipeline_mode<synchronous>, transform_indices = @transform_5, window_bounds = array<i64: 32, 128>}, {pipeline_mode = #tpu.pipeline_mode<synchronous>, transform_indices = @transform_6, window_bounds = array<i64: 1, 128>}, {transform_indices = @transform_7, window_bounds = array<i64: 8, 128>}]} {
    %c0 = arith.constant 0 : index
    %c0_0 = arith.constant 0 : index
    %0 = vector.load %arg1[%c0, %c0_0] : memref<8x16xbf16, #tpu.memory_space<vmem>>, vector<8x16xbf16>
    %c0_1 = arith.constant 0 : index
    %c0_2 = arith.constant 0 : index
    %1 = vector.load %arg2[%c0_1, %c0_2] : memref<16x32xbf16, #tpu.memory_space<vmem>>, vector<16x32xbf16>
    %c0_3 = arith.constant 0 : index
    %c0_4 = arith.constant 0 : index
    %2 = vector.load %arg3[%c0_3, %c0_4] : memref<1x32xf32, #tpu.memory_space<vmem>>, vector<1x32xf32>
    %cst = arith.constant dense<0.000000e+00> : vector<8x32xf32>
    %3 = tpu.matmul %0, %1, %cst {dimension_numbers = #tpu.dot_dimension_numbers<[1], [0], [0], [1], [0, 0, 1, 1], [], []>} : vector<8x16xbf16>, vector<16x32xbf16>, vector<8x32xf32> -> vector<8x32xf32>
    %4 = vector.broadcast %2 : vector<1x32xf32> to vector<8x32xf32>
    %5 = arith.addf %3, %4 : vector<8x32xf32>
    %6 = math.tanh %5 : vector<8x32xf32>
    %7 = arith.truncf %6 : vector<8x32xf32> to vector<8x32xbf16>
    %c0_5 = arith.constant 0 : index
    %c0_6 = arith.constant 0 : index
    %8 = vector.load %arg4[%c0_5, %c0_6] : memref<32x32xbf16, #tpu.memory_space<vmem>>, vector<32x32xbf16>
    %c0_7 = arith.constant 0 : index
    %c0_8 = arith.constant 0 : index
    %9 = vector.load %arg5[%c0_7, %c0_8] : memref<1x32xf32, #tpu.memory_space<vmem>>, vector<1x32xf32>
    %cst_9 = arith.constant dense<0.000000e+00> : vector<8x32xf32>
    %10 = tpu.matmul %7, %8, %cst_9 {dimension_numbers = #tpu.dot_dimension_numbers<[1], [0], [0], [1], [0, 0, 1, 1], [], []>} : vector<8x32xbf16>, vector<32x32xbf16>, vector<8x32xf32> -> vector<8x32xf32>
    %11 = vector.broadcast %9 : vector<1x32xf32> to vector<8x32xf32>
    %12 = arith.addf %10, %11 : vector<8x32xf32>
    %13 = math.tanh %12 : vector<8x32xf32>
    %14 = arith.truncf %13 : vector<8x32xf32> to vector<8x32xbf16>
    %c0_10 = arith.constant 0 : index
    %c0_11 = arith.constant 0 : index
    %15 = vector.load %arg6[%c0_10, %c0_11] : memref<32x128xbf16, #tpu.memory_space<vmem>>, vector<32x128xbf16>
    %cst_12 = arith.constant dense<0.000000e+00> : vector<8x128xf32>
    %16 = tpu.matmul %14, %15, %cst_12 {dimension_numbers = #tpu.dot_dimension_numbers<[1], [0], [0], [1], [0, 0, 1, 1], [], []>} : vector<8x32xbf16>, vector<32x128xbf16>, vector<8x128xf32> -> vector<8x128xf32>
    %c0_13 = arith.constant 0 : index
    %c0_14 = arith.constant 0 : index
    %17 = vector.load %arg7[%c0_13, %c0_14] : memref<1x128xf32, #tpu.memory_space<vmem>>, vector<1x128xf32>
    %18 = vector.broadcast %17 : vector<1x128xf32> to vector<8x128xf32>
    %19 = arith.addf %16, %18 : vector<8x128xf32>
    %c0_15 = arith.constant 0 : index
    %c0_16 = arith.constant 0 : index
    %20 = vector.load %arg8[%c0_15, %c0_16] : memref<8x128xf32, #tpu.memory_space<vmem>>, vector<8x128xf32>
    tpu.vector_store %arg8[%c0_15, %c0_16], %19 {strides = array<i32>} : memref<8x128xf32, #tpu.memory_space<vmem>>, vector<8x128xf32>,
    return
  }
  func.func @transform_0(%arg0: i32) -> (i32, i32) {
    %c0_i32 = arith.constant 0 : i32
    %c0_i32_0 = arith.constant 0 : i32
    return %arg0, %c0_i32 : i32, i32
  }
  func.func @transform_1(%arg0: i32) -> (i32, i32) {
    %c0_i32 = arith.constant 0 : i32
    %c0_i32_0 = arith.constant 0 : i32
    %c0_i32_1 = arith.constant 0 : i32
    return %c0_i32, %c0_i32_0 : i32, i32
  }
  func.func @transform_2(%arg0: i32) -> (i32, i32) {
    %c0_i32 = arith.constant 0 : i32
    %c0_i32_0 = arith.constant 0 : i32
    %c0_i32_1 = arith.constant 0 : i32
    return %c0_i32, %c0_i32_0 : i32, i32
  }
  func.func @transform_3(%arg0: i32) -> (i32, i32) {
    %c0_i32 = arith.constant 0 : i32
    %c0_i32_0 = arith.constant 0 : i32
    %c0_i32_1 = arith.constant 0 : i32
    return %c0_i32, %c0_i32_0 : i32, i32
  }
  func.func @transform_4(%arg0: i32) -> (i32, i32) {
    %c0_i32 = arith.constant 0 : i32
    %c0_i32_0 = arith.constant 0 : i32
    %c0_i32_1 = arith.constant 0 : i32
    return %c0_i32, %c0_i32_0 : i32, i32
  }
  func.func @transform_5(%arg0: i32) -> (i32, i32) {
    %c0_i32 = arith.constant 0 : i32
    %c0_i32_0 = arith.constant 0 : i32
    %c0_i32_1 = arith.constant 0 : i32
    return %c0_i32, %c0_i32_0 : i32, i32
  }
  func.func @transform_6(%arg0: i32) -> (i32, i32) {
    %c0_i32 = arith.constant 0 : i32
    %c0_i32_0 = arith.constant 0 : i32
    %c0_i32_1 = arith.constant 0 : i32
    return %c0_i32, %c0_i32_0 : i32, i32
  }
  func.func @transform_7(%arg0: i32) -> (i32, i32) {
    %c0_i32 = arith.constant 0 : i32
    %c0_i32_0 = arith.constant 0 : i32
    return %arg0, %c0_i32 : i32, i32
  }
}

</mosaic_0001>

<llo_original>
// kernel: ensemble_network_forward.1
$region0: #{ensemble_network_forward.1}
  #allocation0 [shape = 'u32[]', space=smem, size = 0x4, offset = 0x4, fixed_abs, tag = 'smem constant byte address 0x4 - core index']
  #allocation1 [shape = 'u32[72,128]{1,0:T(1,128)}', space=vmem, size = 0x9000, scoped, tag = 'internal scratch']
  %s0 = inlined_call_operand.vmem [shape: bf16[8,16], index: 0, kind: input, shape index: {}]
  %s1 = inlined_call_operand.hbm [shape: bf16[16,32], index: 1, kind: input, shape index: {}]
  %s2 = inlined_call_operand.vmem [shape: f32[1,32], index: 2, kind: input, shape index: {}]
  %s3 = inlined_call_operand.hbm [shape: bf16[32,32], index: 3, kind: input, shape index: {}]
  %s4 = inlined_call_operand.hbm [shape: f32[1,32], index: 4, kind: input, shape index: {}]
  %s5 = inlined_call_operand.vmem [shape: bf16[32,128], index: 5, kind: input, shape index: {}]
  %s6 = inlined_call_operand.hbm [shape: f32[1,128], index: 6, kind: input, shape index: {}]
  %s7 = inlined_call_operand.vmem [shape: f32[8,128], index: 7, kind: output, shape index: {}]
  %s8 = sld [smem:[#allocation0]]
  $region54: #{ensemble_network_forward.1} parent=0
    _
  %s10 = ssub.s32 1, %s8
  %s11 = scalar_select 0, %s10, %s8
  $region1: #{ensemble_network_forward.1} parent=0
    #allocation2 [shape = 'u8[4096]{0}', space=vmem, size = 0x1000, scoped, tag = 'input window, operand 1, single buffered']
    #allocation3 [shape = 's32[1]{0}', space=sflag, size = 0x4, scoped, tag = 'scoped memory for ensemble_network_forward.1']
    #allocation4 [shape = 'u8[8192]{0}', space=vmem, size = 0x2000, scoped, tag = 'input window, operand 3, single buffered']
    #allocation5 [shape = 's32[1]{0}', space=sflag, size = 0x4, scoped, tag = 'scoped memory for ensemble_network_forward.1']
    #allocation6 [shape = 'u8[512]{0}', space=vmem, size = 0x400, scoped, tag = 'input window, operand 4, single buffered']
    #allocation7 [shape = 'u8[512]{0}', space=vmem, size = 0x400, scoped, tag = 'input window, operand 6, single buffered']
    #allocation8 [shape = 's32[1]{0}', space=sflag, size = 0x4, scoped, tag = 'scoped memory for ensemble_network_forward.1']
    %12 = vsyncpa [#allocation3], 0
    %13 = vsyncpa [#allocation5], 0
    %14 = vsyncpa [#allocation8], 0
    // Predicated region
    $region2: #{ensemble_network_forward.1} parent=1 // pred_check
      _
    $region3: #{ensemble_network_forward.1} parent=1 // pred_check_branch
      %16 = sbr.rel (0) target = $region5
    $region4: #{ensemble_network_forward.1} parent=1 // pred_region
      _
    $region5: #{ensemble_network_forward.1} parent=1 // pred_fallthru
      _
    // Predicated region
    $region6: #{ensemble_network_forward.1} parent=1 // pred_check
      _
    $region7: #{ensemble_network_forward.1} parent=1 // pred_check_branch
      %18 = sbr.rel (0) target = $region9
    $region8: #{ensemble_network_forward.1} parent=1 // pred_region
      %20 = vsyncadd [#allocation3], 0
      %s21 = sshll.u32 %s1, 4
      %s22 = int_to_ptr.hbm [resolvable:$true] %s21
      %s23 = sshll.u32 [#allocation2], 4
      %s24 = int_to_ptr.vmem [resolvable:$true] %s23
      %29 = dma.hbm_to_vmem [thread:$0]  %s22, 128, %s24, [#allocation3], 64, 64, 4
    $region9: #{ensemble_network_forward.1} parent=1 // pred_fallthru
      _
    // Predicated region
    $region10: #{ensemble_network_forward.1} parent=1 // pred_check
      _
    $region11: #{ensemble_network_forward.1} parent=1 // pred_check_branch
      %31 = sbr.rel (0) target = $region13
    $region12: #{ensemble_network_forward.1} parent=1 // pred_region
      _
    $region13: #{ensemble_network_forward.1} parent=1 // pred_fallthru
      _
    // Predicated region
    $region14: #{ensemble_network_forward.1} parent=1 // pred_check
      _
    $region15: #{ensemble_network_forward.1} parent=1 // pred_check_branch
      %33 = sbr.rel (0) target = $region17
    $region16: #{ensemble_network_forward.1} parent=1 // pred_region
      %35 = vsyncadd [#allocation5], 0
      %s36 = sshll.u32 %s3, 4
      %s37 = int_to_ptr.hbm [resolvable:$true] %s36
      %s38 = sshll.u32 [#allocation4], 4
      %s39 = int_to_ptr.vmem [resolvable:$true] %s38
      %44 = dma.hbm_to_vmem [thread:$0]  %s37, 256, %s39, [#allocation5], 64, 64, 4
    $region17: #{ensemble_network_forward.1} parent=1 // pred_fallthru
      _
    // Predicated region
    $region18: #{ensemble_network_forward.1} parent=1 // pred_check
      _
    $region19: #{ensemble_network_forward.1} parent=1 // pred_check_branch
      %46 = sbr.rel (0) target = $region21
    $region20: #{ensemble_network_forward.1} parent=1 // pred_region
      %48 = vsyncadd [#allocation5], 0
      %s50 = sshll.u32 %s4, 4
      %s51 = int_to_ptr.hbm [resolvable:$true] %s50
      %s52 = sshll.u32 [#allocation6], 4
      %s53 = int_to_ptr.vmem [resolvable:$true] %s52
      %55 = dma.hbm_to_vmem [thread:$0]  %s51, 16, %s53, [#allocation5]
    $region21: #{ensemble_network_forward.1} parent=1 // pred_fallthru
      _
    // Predicated region
    $region22: #{ensemble_network_forward.1} parent=1 // pred_check
      _
    $region23: #{ensemble_network_forward.1} parent=1 // pred_check_branch
      %57 = sbr.rel (0) target = $region25
    $region24: #{ensemble_network_forward.1} parent=1 // pred_region
      _
    $region25: #{ensemble_network_forward.1} parent=1 // pred_fallthru
      _
    // Predicated region
    $region26: #{ensemble_network_forward.1} parent=1 // pred_check
      _
    $region27: #{ensemble_network_forward.1} parent=1 // pred_check_branch
      %59 = sbr.rel (0) target = $region29
    $region28: #{ensemble_network_forward.1} parent=1 // pred_region
      %61 = vsyncadd [#allocation8], 0
      %s63 = sshll.u32 %s6, 4
      %s64 = int_to_ptr.hbm [resolvable:$true] %s63
      %s65 = sshll.u32 [#allocation7], 4
      %s66 = int_to_ptr.vmem [resolvable:$true] %s65
      %68 = dma.hbm_to_vmem [thread:$0]  %s64, 16, %s66, [#allocation8]
    $region29: #{ensemble_network_forward.1} parent=1 // pred_fallthru
      _
    // Predicated region
    $region30: #{ensemble_network_forward.1} parent=1 // pred_check
      _
    $region31: #{ensemble_network_forward.1} parent=1 // pred_check_branch
      %70 = sbr.rel (0) target = $region33
    $region32: #{ensemble_network_forward.1} parent=1 // pred_region
      %72 = dma.done [#allocation3], 128
    $region33: #{ensemble_network_forward.1} parent=1 // pred_fallthru
      _
    // Predicated region
    $region34: #{ensemble_network_forward.1} parent=1 // pred_check
      _
    $region35: #{ensemble_network_forward.1} parent=1 // pred_check_branch
      %74 = sbr.rel (0) target = $region37
    $region36: #{ensemble_network_forward.1} parent=1 // pred_region
      %76 = dma.done [#allocation5], 256
    $region37: #{ensemble_network_forward.1} parent=1 // pred_fallthru
      _
    // Predicated region
    $region38: #{ensemble_network_forward.1} parent=1 // pred_check
      _
    $region39: #{ensemble_network_forward.1} parent=1 // pred_check_branch
      %78 = sbr.rel (0) target = $region41
    $region40: #{ensemble_network_forward.1} parent=1 // pred_region
      %80 = dma.done [#allocation5], 16
    $region41: #{ensemble_network_forward.1} parent=1 // pred_fallthru
      _
    // Predicated region
    $region42: #{ensemble_network_forward.1} parent=1 // pred_check
      _
    $region43: #{ensemble_network_forward.1} parent=1 // pred_check_branch
      %82 = sbr.rel (0) target = $region45
    $region44: #{ensemble_network_forward.1} parent=1 // pred_region
      %84 = dma.done [#allocation8], 16
    $region45: #{ensemble_network_forward.1} parent=1 // pred_fallthru
      _
    %v86 = vld [vmem:[%s0] sm:$0xf]
    %v87 = vld [vmem:[#allocation2] sm:$0xf]
    %v88 = vld [vmem:[#allocation2 + $0x4] sm:$0xf]
    %v89 = vld [vmem:[%s2] sm:$0x1]
    %v91 = vperm.slane %v89, 0
    %v95 = vunpack.c.l.b16 %v87
    %v96 = vunpack.c.l.b16 %v88
    %v97 = vpack.c.b16 %v96, %v95
    %vm99 = vcmask 130048
    %v101 = vsel %vm99, %v86, 0
    %103 = vmatpush.bf16.msra.mxu0 0
    %104 = vmatpush.bf16.msra.mxu0 0
    %105 = vmatpush.bf16.msra.mxu0 0
    %106 = vmatpush.bf16.msra.mxu0 0
    %107 = vmatpush.bf16.msra.mxu0 0
    %108 = vmatpush.bf16.msra.mxu0 0
    %109 = vmatpush.bf16.msra.mxu0 0
    %110 = vmatpush.bf16.msra.mxu0 %v97
    %111 = vmatmul.bf16.gmra.mxu0 %v101
    %v112 = vpop.f32.mrf.mxu0
    %v113 = vadd.f32 %v91, %v112
    %v114 = vpop.f32.mrf.mxu0
    %115 = vdwg.mxu0
    %v116 = vtanh.pop %v113
    %v117 = vpack.c.bf16 %v116, %v116
    %v118 = vld [vmem:[#allocation4] sm:$0xf]
    %v119 = vld [vmem:[#allocation4 + $0x4] sm:$0xf]
    %v120 = vld [vmem:[#allocation4 + $0x8] sm:$0xf]
    %v121 = vld [vmem:[#allocation4 + $0xc] sm:$0xf]
    %v122 = vld [vmem:[#allocation6] sm:$0x1]
    %v124 = vperm.slane %v122, 0
    %v130 = vunpack.c.l.b16 %v118
    %v131 = vunpack.c.l.b16 %v119
    %v132 = vunpack.c.l.b16 %v120
    %v133 = vunpack.c.l.b16 %v121
    %v134 = vpack.c.b16 %v131, %v130
    %v135 = vpack.c.b16 %v133, %v132
    %vm138 = vcmask 261120
    %v140 = vsel %vm138, %v117, 0
    %142 = vmatpush.bf16.msra.mxu0 0
    %143 = vmatpush.bf16.msra.mxu0 0
    %144 = vmatpush.bf16.msra.mxu0 0
    %145 = vmatpush.bf16.msra.mxu0 0
    %146 = vmatpush.bf16.msra.mxu0 0
    %147 = vmatpush.bf16.msra.mxu0 0
    %148 = vmatpush.bf16.msra.mxu0 %v135
    %149 = vmatpush.bf16.msra.mxu0 %v134
    %150 = vmatmul.bf16.gmra.mxu0 %v140
    %v151 = vpop.f32.mrf.mxu0
    %v152 = vadd.f32 %v124, %v151
    %v153 = vpop.f32.mrf.mxu0
    %154 = vdwg.mxu0
    %v155 = vtanh.pop %v152
    %v156 = vpack.c.bf16 %v155, %v155
    %v157 = vld [vmem:[%s5] sm:$0xf]
    %v158 = vld [vmem:[%s5 + $0x4] sm:$0xf]
    %v159 = vld [vmem:[%s5 + $0x8] sm:$0xf]
    %v160 = vld [vmem:[%s5 + $0xc] sm:$0xf]
    %v161 = vld [vmem:[#allocation7] sm:$0x1]
    %v163 = vperm.slane %v161, 0
    %v169 = vunpack.c.l.b16 %v157
    %v170 = vunpack.c.l.b16 %v158
    %v171 = vunpack.c.l.b16 %v159
    %v172 = vunpack.c.l.b16 %v160
    %v173 = vpack.c.b16 %v170, %v169
    %v174 = vpack.c.b16 %v172, %v171
    %v178 = vsel %vm138, %v156, 0
    %180 = vmatpush.bf16.msra.mxu0 0
    %181 = vmatpush.bf16.msra.mxu0 0
    %182 = vmatpush.bf16.msra.mxu0 0
    %183 = vmatpush.bf16.msra.mxu0 0
    %184 = vmatpush.bf16.msra.mxu0 0
    %185 = vmatpush.bf16.msra.mxu0 0
    %186 = vmatpush.bf16.msra.mxu0 %v174
    %187 = vmatpush.bf16.msra.mxu0 %v173
    %188 = vmatmul.bf16.gmra.mxu0 %v178
    %v189 = vpop.f32.mrf.mxu0
    %v190 = vadd.f32 %v163, %v189
    %v191 = vpop.f32.mrf.mxu0
    %192 = vdwg.mxu0
    %193 = vst [vmem:[%s7] sm:$0xff] %v190
    // Predicated region
    $region46: #{ensemble_network_forward.1} parent=1 // pred_check
      _
    $region47: #{ensemble_network_forward.1} parent=1 // pred_check_branch
      %195 = sbr.rel (0) target = $region49
    $region48: #{ensemble_network_forward.1} parent=1 // pred_region
      _
    $region49: #{ensemble_network_forward.1} parent=1 // pred_fallthru
      _
    // Predicated region
    $region50: #{ensemble_network_forward.1} parent=1 // pred_check
      _
    $region51: #{ensemble_network_forward.1} parent=1 // pred_check_branch
      %197 = sbr.rel (0) target = $region53
    $region52: #{ensemble_network_forward.1} parent=1 // pred_region
      _
    $region53: #{ensemble_network_forward.1} parent=1 // pred_fallthru
      _
    %198 = vsyncpa [#allocation3], 1
    %199 = vsyncpa [#allocation5], 1
    %200 = vsyncpa [#allocation8], 1

</llo_original>
